<compile_context>
chip_gen: v7x
topology: tpu7x:2x2x1
jax: 0.10.0
libtpu: 0.0.40
codegen_flags: <defaults>
</compile_context>

<pallas_src>
import functools

import jax
import jax.numpy as jnp
from jax.experimental import pallas as pl
from jax.experimental.pallas import tpu as pltpu

_HIDDEN = 256


def _round_up(x, m):
    return ((x + m - 1) // m) * m


def actor_mlp_kernel(x_ref, w1_ref, b1_ref, w2_ref, b2_ref, w3_ref, b3_ref,
                     o_ref, *, max_action):
    """Fused 3-layer MLP for one batch tile: relu -> relu -> max_action*tanh.

    x_ref : (TB, S) already-sliced state rows (history step 0).
    w*_ref: weights stored (in_features, out_features), compute dtype.
    b*_ref: biases (1, out_features) f32 (added to the f32 accumulator).
    o_ref : (TB, A) output block.
    """
    cd = w1_ref.dtype
    x = x_ref[...].astype(cd)                                           # (TB, S)
    h1 = jnp.dot(x, w1_ref[...], preferred_element_type=jnp.float32)
    h1 = jnp.maximum(h1 + b1_ref[...], 0.0)                             # (TB, 256) f32
    h2 = jnp.dot(h1.astype(cd), w2_ref[...],
                 preferred_element_type=jnp.float32)
    h2 = jnp.maximum(h2 + b2_ref[...], 0.0)                             # (TB, 256) f32
    y = jnp.dot(h2.astype(cd), w3_ref[...],
                preferred_element_type=jnp.float32)
    y = jnp.tanh(y + b3_ref[...])                                       # (TB, A) f32
    o_ref[...] = (max_action * y).astype(o_ref.dtype)


def actor_forward(state, params, max_action, *, batch_tile=512,
                  compute_dtype=jnp.bfloat16):
    """state: (B, history_len, state_dim) f32 -> (B, action_dim) f32."""
    B, H, S = state.shape
    A = params["w3"].shape[1]

    # Fold the `state[:, 0, :]` select into the wrapper: one strided B*S pass
    # instead of streaming the full (B, H, S) window into the kernel.
    x2d = state[:, 0, :]                                                # (B, S)

    # Batch tile:
    #  * multiple of 8 (f32 sublanes),
    #  * at most ceil(B/2) so the 1-D "parallel" grid has >= 2 blocks whenever
    #    B permits (keeps both v7x TensorCores busy; ~0.35 us/step overhead is
    #    negligible on single-TC v5e/v6e),
    #  * capped at batch_tile (512 default) for big-B MXU-friendly tiles,
    #  * capped by a small VMEM budget for the double-buffered in/out blocks
    #    plus f32 activations so v7x's 64 MiB VMEM stays safe for wide states.
    TB = min(batch_tile, _round_up(max(1, (B + 1) // 2), 8))
    vmem_budget_rows = (8 << 20) // (4 * (S + A + 3 * _HIDDEN))
    TB = max(8, min(TB, _round_up(max(1, vmem_budget_rows), 8)))
    grid = (pl.cdiv(B, TB),)

    # Weights in compute dtype (bf16 default: MXU-native on v5e/v6e/v7x and
    # halves resident weight VMEM); biases stay f32.
    w1 = params["w1"].astype(compute_dtype)
    w2 = params["w2"].astype(compute_dtype)
    w3 = params["w3"].astype(compute_dtype)
    b1, b2, b3 = params["b1"], params["b2"], params["b3"]

    const2d = lambda i: (0, 0)   # weights/biases stay resident across steps

    wbytes = jnp.dtype(compute_dtype).itemsize
    cost = pl.CostEstimate(
        flops=2 * B * (S * _HIDDEN + _HIDDEN * _HIDDEN + _HIDDEN * A),
        transcendentals=B * A,
        bytes_accessed=(4 * B * S
                        + wbytes * (S * _HIDDEN + _HIDDEN * _HIDDEN
                                    + _HIDDEN * A)
                        + 4 * (2 * _HIDDEN + A)
                        + 4 * B * A),
    )

    kernel = functools.partial(actor_mlp_kernel, max_action=float(max_action))

    out = pl.pallas_call(
        kernel,
        out_shape=jax.ShapeDtypeStruct((B, A), jnp.float32),
        grid=grid,
        in_specs=[
            pl.BlockSpec((TB, S), lambda i: (i, 0)),
            pl.BlockSpec((S, _HIDDEN), const2d),
            pl.BlockSpec((1, _HIDDEN), const2d),
            pl.BlockSpec((_HIDDEN, _HIDDEN), const2d),
            pl.BlockSpec((1, _HIDDEN), const2d),
            pl.BlockSpec((_HIDDEN, A), const2d),
            pl.BlockSpec((1, A), const2d),
        ],
        out_specs=pl.BlockSpec((TB, A), lambda i: (i, 0)),
        compiler_params=pltpu.CompilerParams(
            dimension_semantics=("parallel",)),
        cost_estimate=cost,
    )(x2d, w1, b1, w2, b2, w3, b3)

    return out


def init_actor_params(key, state_dim, action_dim):
    """Deterministic init mimicking nn.Linear's U(-1/sqrt(fan_in), +1/sqrt(fan_in))."""
    def linear(key, fan_in, fan_out):
        kw, kb = jax.random.split(key)
        bound = 1.0 / jnp.sqrt(fan_in)
        w = jax.random.uniform(kw, (fan_in, fan_out), jnp.float32, -bound, bound)
        b = jax.random.uniform(kb, (1, fan_out), jnp.float32, -bound, bound)
        return w, b

    k1, k2, k3 = jax.random.split(key, 3)
    w1, b1 = linear(k1, state_dim, _HIDDEN)
    w2, b2 = linear(k2, _HIDDEN, _HIDDEN)
    w3, b3 = linear(k3, _HIDDEN, action_dim)
    return {"w1": w1, "b1": b1, "w2": w2, "b2": b2, "w3": w3, "b3": b3}


def actor_forward_ref(state, params, max_action):
    """Pure-JAX reference for correctness check."""
    x = state[:, 0, :]
    h1 = jnp.maximum(x @ params["w1"] + params["b1"], 0.0)
    h2 = jnp.maximum(h1 @ params["w2"] + params["b2"], 0.0)
    return max_action * jnp.tanh(h2 @ params["w3"] + params["b3"])


if __name__ == "__main__":
    # Small shapes consistent with the module's forward.
    batch = 2
    history_len = 4
    state_dim = 32
    action_dim = 8
    max_action = 2.0

    key = jax.random.PRNGKey(0)
    k_state, k_params = jax.random.split(key)

    state = jax.random.normal(
        k_state, (batch, history_len, state_dim), dtype=jnp.float32)
    params = init_actor_params(k_params, state_dim, action_dim)

    ref = actor_forward_ref(state, params, max_action)

    # f32 compute: exact path.
    out_f32 = jax.block_until_ready(
        actor_forward(state, params, max_action, compute_dtype=jnp.float32))
    assert out_f32.shape == (batch, action_dim)
    assert jnp.allclose(out_f32, ref, atol=1e-5, rtol=1e-5), "f32 mismatch vs reference"

    # Default bf16 compute (f32 accumulation): loose tolerance vs f32 reference.
    out_bf16 = jax.block_until_ready(actor_forward(state, params, max_action))
    assert out_bf16.shape == (batch, action_dim)
    assert jnp.allclose(out_bf16, ref, atol=1e-1, rtol=1e-1), "bf16 mismatch vs reference"

    print("KERNEL_OK")
</pallas_src>

<mosaic_0001>
module attributes {stable_mosaic.version = 11 : i64} {
  func.func @actor_mlp_kernel(%arg0: i32, %arg1: memref<8x32xf32, #tpu.memory_space<vmem>>, %arg2: memref<32x256xf32, #tpu.memory_space<vmem>>, %arg3: memref<1x256xf32, #tpu.memory_space<vmem>>, %arg4: memref<256x256xf32, #tpu.memory_space<vmem>>, %arg5: memref<1x256xf32, #tpu.memory_space<vmem>>, %arg6: memref<256x8xf32, #tpu.memory_space<vmem>>, %arg7: memref<1x8xf32, #tpu.memory_space<vmem>>, %arg8: memref<8x8xf32, #tpu.memory_space<vmem>>) attributes {dimension_semantics = [#tpu.dimension_semantics<parallel>], iteration_bounds = array<i64: 1>, scalar_prefetch = 0 : i64, scratch_operands = 0 : i64, tpu.core_type = #tpu.core_type<tc>, window_params = [{transform_indices = @transform_0, window_bounds = array<i64: 8, 32>}, {pipeline_mode = #tpu.pipeline_mode<synchronous>, transform_indices = @transform_1, window_bounds = array<i64: 32, 256>}, {pipeline_mode = #tpu.pipeline_mode<synchronous>, transform_indices = @transform_2, window_bounds = array<i64: 1, 256>}, {pipeline_mode = #tpu.pipeline_mode<synchronous>, transform_indices = @transform_3, window_bounds = array<i64: 256, 256>}, {pipeline_mode = #tpu.pipeline_mode<synchronous>, transform_indices = @transform_4, window_bounds = array<i64: 1, 256>}, {pipeline_mode = #tpu.pipeline_mode<synchronous>, transform_indices = @transform_5, window_bounds = array<i64: 256, 8>}, {pipeline_mode = #tpu.pipeline_mode<synchronous>, transform_indices = @transform_6, window_bounds = array<i64: 1, 8>}, {transform_indices = @transform_7, window_bounds = array<i64: 8, 8>}]} {
    %c0 = arith.constant 0 : index
    %c0_0 = arith.constant 0 : index
    %0 = vector.load %arg1[%c0, %c0_0] : memref<8x32xf32, #tpu.memory_space<vmem>>, vector<8x32xf32>
    %c0_1 = arith.constant 0 : index
    %c0_2 = arith.constant 0 : index
    %1 = vector.load %arg2[%c0_1, %c0_2] : memref<32x256xf32, #tpu.memory_space<vmem>>, vector<32x256xf32>
    %cst = arith.constant dense<0.000000e+00> : vector<8x256xf32>
    %2 = tpu.matmul %0, %1, %cst {dimension_numbers = #tpu.dot_dimension_numbers<[1], [0], [0], [1], [0, 0, 1, 1], [], []>} : vector<8x32xf32>, vector<32x256xf32>, vector<8x256xf32> -> vector<8x256xf32>
    %c0_3 = arith.constant 0 : index
    %c0_4 = arith.constant 0 : index
    %3 = vector.load %arg3[%c0_3, %c0_4] : memref<1x256xf32, #tpu.memory_space<vmem>>, vector<1x256xf32>
    %4 = vector.broadcast %3 : vector<1x256xf32> to vector<8x256xf32>
    %5 = arith.addf %2, %4 : vector<8x256xf32>
    %cst_5 = arith.constant 0.000000e+00 : f32
    %6 = vector.broadcast %cst_5 : f32 to vector<8x256xf32>
    %7 = arith.maximumf %5, %6 : vector<8x256xf32>
    %c0_6 = arith.constant 0 : index
    %c0_7 = arith.constant 0 : index
    %8 = vector.load %arg4[%c0_6, %c0_7] : memref<256x256xf32, #tpu.memory_space<vmem>>, vector<256x256xf32>
    %cst_8 = arith.constant dense<0.000000e+00> : vector<8x256xf32>
    %9 = tpu.matmul %7, %8, %cst_8 {dimension_numbers = #tpu.dot_dimension_numbers<[1], [0], [0], [1], [0, 0, 1, 1], [], []>} : vector<8x256xf32>, vector<256x256xf32>, vector<8x256xf32> -> vector<8x256xf32>
    %c0_9 = arith.constant 0 : index
    %c0_10 = arith.constant 0 : index
    %10 = vector.load %arg5[%c0_9, %c0_10] : memref<1x256xf32, #tpu.memory_space<vmem>>, vector<1x256xf32>
    %11 = vector.broadcast %10 : vector<1x256xf32> to vector<8x256xf32>
    %12 = arith.addf %9, %11 : vector<8x256xf32>
    %cst_11 = arith.constant 0.000000e+00 : f32
    %13 = vector.broadcast %cst_11 : f32 to vector<8x256xf32>
    %14 = arith.maximumf %12, %13 : vector<8x256xf32>
    %c0_12 = arith.constant 0 : index
    %c0_13 = arith.constant 0 : index
    %15 = vector.load %arg6[%c0_12, %c0_13] : memref<256x8xf32, #tpu.memory_space<vmem>>, vector<256x8xf32>
    %cst_14 = arith.constant dense<0.000000e+00> : vector<8x8xf32>
    %16 = tpu.matmul %14, %15, %cst_14 {dimension_numbers = #tpu.dot_dimension_numbers<[1], [0], [0], [1], [0, 0, 1, 1], [], []>} : vector<8x256xf32>, vector<256x8xf32>, vector<8x8xf32> -> vector<8x8xf32>
    %c0_15 = arith.constant 0 : index
    %c0_16 = arith.constant 0 : index
    %17 = vector.load %arg7[%c0_15, %c0_16] : memref<1x8xf32, #tpu.memory_space<vmem>>, vector<1x8xf32>
    %18 = vector.broadcast %17 : vector<1x8xf32> to vector<8x8xf32>
    %19 = arith.addf %16, %18 : vector<8x8xf32>
    %20 = math.tanh %19 : vector<8x8xf32>
    %cst_17 = arith.constant 2.000000e+00 : f32
    %21 = vector.broadcast %cst_17 : f32 to vector<8x8xf32>
    %22 = arith.mulf %21, %20 : vector<8x8xf32>
    %c0_18 = arith.constant 0 : index
    %c0_19 = arith.constant 0 : index
    %23 = vector.load %arg8[%c0_18, %c0_19] : memref<8x8xf32, #tpu.memory_space<vmem>>, vector<8x8xf32>
    tpu.vector_store %arg8[%c0_18, %c0_19], %22 {strides = array<i32>} : memref<8x8xf32, #tpu.memory_space<vmem>>, vector<8x8xf32>,
    return
  }
  func.func @transform_0(%arg0: i32) -> (i32, i32) {
    %c0_i32 = arith.constant 0 : i32
    %c0_i32_0 = arith.constant 0 : i32
    return %arg0, %c0_i32 : i32, i32
  }
  func.func @transform_1(%arg0: i32) -> (i32, i32) {
    %c0_i32 = arith.constant 0 : i32
    %c0_i32_0 = arith.constant 0 : i32
    %c0_i32_1 = arith.constant 0 : i32
    return %c0_i32, %c0_i32_0 : i32, i32
  }
  func.func @transform_2(%arg0: i32) -> (i32, i32) {
    %c0_i32 = arith.constant 0 : i32
    %c0_i32_0 = arith.constant 0 : i32
    %c0_i32_1 = arith.constant 0 : i32
    return %c0_i32, %c0_i32_0 : i32, i32
  }
  func.func @transform_3(%arg0: i32) -> (i32, i32) {
    %c0_i32 = arith.constant 0 : i32
    %c0_i32_0 = arith.constant 0 : i32
    %c0_i32_1 = arith.constant 0 : i32
    return %c0_i32, %c0_i32_0 : i32, i32
  }
  func.func @transform_4(%arg0: i32) -> (i32, i32) {
    %c0_i32 = arith.constant 0 : i32
    %c0_i32_0 = arith.constant 0 : i32
    %c0_i32_1 = arith.constant 0 : i32
    return %c0_i32, %c0_i32_0 : i32, i32
  }
  func.func @transform_5(%arg0: i32) -> (i32, i32) {
    %c0_i32 = arith.constant 0 : i32
    %c0_i32_0 = arith.constant 0 : i32
    %c0_i32_1 = arith.constant 0 : i32
    return %c0_i32, %c0_i32_0 : i32, i32
  }
  func.func @transform_6(%arg0: i32) -> (i32, i32) {
    %c0_i32 = arith.constant 0 : i32
    %c0_i32_0 = arith.constant 0 : i32
    %c0_i32_1 = arith.constant 0 : i32
    return %c0_i32, %c0_i32_0 : i32, i32
  }
  func.func @transform_7(%arg0: i32) -> (i32, i32) {
    %c0_i32 = arith.constant 0 : i32
    %c0_i32_0 = arith.constant 0 : i32
    return %arg0, %c0_i32 : i32, i32
  }
}

</mosaic_0001>

<llo_original>
// kernel: tpu_custom_call.1
$region0: #{tpu_custom_call.1}
  #allocation0 [shape = 'u32[]', space=smem, size = 0x4, offset = 0x4, fixed_abs, tag = 'smem constant byte address 0x4 - core index']
  #allocation1 [shape = 'u32[144,128]{1,0:T(1,128)}', space=vmem, size = 0x12000, scoped, tag = 'internal scratch']
  %s0 = inlined_call_operand.vmem [shape: f32[2,32], index: 0, kind: input, shape index: {}]
  %s1 = inlined_call_operand.vmem [shape: f32[32,256], index: 1, kind: input, shape index: {}]
  %s2 = inlined_call_operand.vmem [shape: f32[1,256], index: 2, kind: input, shape index: {}]
  %s3 = inlined_call_operand.hbm [shape: f32[256,256], index: 3, kind: input, shape index: {}]
  %s4 = inlined_call_operand.vmem [shape: f32[1,256], index: 4, kind: input, shape index: {}]
  %s5 = inlined_call_operand.vmem [shape: f32[256,8], index: 5, kind: input, shape index: {}]
  %s6 = inlined_call_operand.vmem [shape: f32[1,8], index: 6, kind: input, shape index: {}]
  %s7 = inlined_call_operand.hbm [shape: f32[2,8], index: 7, kind: output, shape index: {}]
  %s8 = sld [smem:[#allocation0]]
  $region42: #{tpu_custom_call.1} parent=0
    _
  %s10 = ssub.s32 1, %s8
  %s11 = scalar_select 0, %s10, %s8
  $region1: #{tpu_custom_call.1} parent=0
    #allocation2 [shape = 'u8[262144]{0}', space=vmem, size = 0x40000, scoped, tag = 'input window, operand 3, single buffered']
    #allocation3 [shape = 's32[1]{0}', space=sflag, size = 0x4, scoped, tag = 'scoped memory for tpu_custom_call.1']
    #allocation4 [shape = 's32[1]{0}', space=sflag, size = 0x4, scoped, tag = 'scoped memory for tpu_custom_call.1']
    #allocation5 [shape = 'u8[4096]{0}', space=vmem, size = 0x1000, scoped, tag = 'output window, operand 0, single buffered']
    %12 = vsyncpa [#allocation3], 0
    %13 = vsyncpa [#allocation4], 0
    // Predicated region
    $region2: #{tpu_custom_call.1} parent=1 // pred_check
      _
    $region3: #{tpu_custom_call.1} parent=1 // pred_check_branch
      %15 = sbr.rel (0) target = $region5
    $region4: #{tpu_custom_call.1} parent=1 // pred_region
      _
    $region5: #{tpu_custom_call.1} parent=1 // pred_fallthru
      _
    // Predicated region
    $region6: #{tpu_custom_call.1} parent=1 // pred_check
      _
    $region7: #{tpu_custom_call.1} parent=1 // pred_check_branch
      %17 = sbr.rel (0) target = $region9
    $region8: #{tpu_custom_call.1} parent=1 // pred_region
      _
    $region9: #{tpu_custom_call.1} parent=1 // pred_fallthru
      _
    // Predicated region
    $region10: #{tpu_custom_call.1} parent=1 // pred_check
      _
    $region11: #{tpu_custom_call.1} parent=1 // pred_check_branch
      %19 = sbr.rel (0) target = $region13
    $region12: #{tpu_custom_call.1} parent=1 // pred_region
      _
    $region13: #{tpu_custom_call.1} parent=1 // pred_fallthru
      _
    // Predicated region
    $region14: #{tpu_custom_call.1} parent=1 // pred_check
      _
    $region15: #{tpu_custom_call.1} parent=1 // pred_check_branch
      %21 = sbr.rel (0) target = $region17
    $region16: #{tpu_custom_call.1} parent=1 // pred_region
      %s23 = ssub.s32 8192, 8192
      %24 = vsyncadd [#allocation3], %s23
      %s25 = sshll.u32 [#allocation2], 4
      %s26 = int_to_ptr.vmem [resolvable:$true] %s25
      %31 = dma.hbm_to_vmem [thread:$0]  %s3, 8192, %s26, [#allocation3], 256, 256, 16
    $region17: #{tpu_custom_call.1} parent=1 // pred_fallthru
      _
    // Predicated region
    $region18: #{tpu_custom_call.1} parent=1 // pred_check
      _
    $region19: #{tpu_custom_call.1} parent=1 // pred_check_branch
      %33 = sbr.rel (0) target = $region21
    $region20: #{tpu_custom_call.1} parent=1 // pred_region
      _
    $region21: #{tpu_custom_call.1} parent=1 // pred_fallthru
      _
    // Predicated region
    $region22: #{tpu_custom_call.1} parent=1 // pred_check
      _
    $region23: #{tpu_custom_call.1} parent=1 // pred_check_branch
      %35 = sbr.rel (0) target = $region25
    $region24: #{tpu_custom_call.1} parent=1 // pred_region
      _
    $region25: #{tpu_custom_call.1} parent=1 // pred_fallthru
      _
    // Predicated region
    $region26: #{tpu_custom_call.1} parent=1 // pred_check
      _
    $region27: #{tpu_custom_call.1} parent=1 // pred_check_branch
      %37 = sbr.rel (0) target = $region29
    $region28: #{tpu_custom_call.1} parent=1 // pred_region
      _
    $region29: #{tpu_custom_call.1} parent=1 // pred_fallthru
      _
    // Predicated region
    $region30: #{tpu_custom_call.1} parent=1 // pred_check
      _
    $region31: #{tpu_custom_call.1} parent=1 // pred_check_branch
      %39 = sbr.rel (0) target = $region33
    $region32: #{tpu_custom_call.1} parent=1 // pred_region
      %40 = dma.done [#allocation3], 8192
    $region33: #{tpu_custom_call.1} parent=1 // pred_fallthru
      _
    %v41 = vld [vmem:[%s0] sm:$0xff]
    %v42 = vld [vmem:[%s1] sm:$0xff]
    %v43 = vld [vmem:[%s1 + $0x8] sm:$0xff]
    %v44 = vld [vmem:[%s1 + $0x10] sm:$0xff]
    %v45 = vld [vmem:[%s1 + $0x18] sm:$0xff]
    %v46 = vld [vmem:[%s1 + $0x20] sm:$0xff]
    %v47 = vld [vmem:[%s1 + $0x28] sm:$0xff]
    %v48 = vld [vmem:[%s1 + $0x30] sm:$0xff]
    %v49 = vld [vmem:[%s1 + $0x38] sm:$0xff]
    %v50 = vld [vmem:[%s2] sm:$0x3]
    %v52 = vlaneseq
    %v53 = vshrl.u32 %v52, 7
    %v54 = vsub.s32 0, %v53
    %v55 = vrot.slane %v50, %v54
    %v56 = vlaneseq
    %v57 = vshrl.u32 %v56, 7
    %v58 = vsub.s32 1, %v57
    %v59 = vrot.slane %v50, %v58
    %vm62 = vcmask 261120
    %v64 = vsel %vm62, %v41, 0
    %66 = vmatprep.subr.mxu0 %v43
    %67 = vmatpush1.msra.mxu0 %v42
    %68 = vmatprep.subr.mxu0 %v45
    %69 = vmatpush1.msra.mxu0 %v44
    %70 = vmatprep.subr.mxu0 %v47
    %71 = vmatpush1.msra.mxu0 %v46
    %72 = vmatprep.subr.mxu0 %v49
    %73 = vmatpush1.msra.mxu0 %v48
    %74 = vmatprep.subr.mxu0 0.0
    %75 = vmatpush1.msra.mxu0 0.0
    %76 = vmatprep.subr.mxu0 0.0
    %77 = vmatpush1.msra.mxu0 0.0
    %78 = vmatprep.subr.mxu0 0.0
    %79 = vmatpush1.msra.mxu0 0.0
    %80 = vmatprep.subr.mxu0 0.0
    %81 = vmatpush1.msra.mxu0 0.0
    %82 = vmatprep.subr.mxu0 0.0
    %83 = vmatpush1.msra.mxu0 0.0
    %84 = vmatprep.subr.mxu0 0.0
    %85 = vmatpush1.msra.mxu0 0.0
    %86 = vmatprep.subr.mxu0 0.0
    %87 = vmatpush1.msra.mxu0 0.0
    %88 = vmatprep.subr.mxu0 0.0
    %89 = vmatpush1.msra.mxu0 0.0
    %90 = vmatprep.subr.mxu0 0.0
    %91 = vmatpush1.msra.mxu0 0.0
    %92 = vmatprep.subr.mxu0 0.0
    %93 = vmatpush1.msra.mxu0 0.0
    %94 = vmatprep.subr.mxu0 0.0
    %95 = vmatpush1.msra.mxu0 0.0
    %96 = vmatprep.subr.mxu0 0.0
    %97 = vmatpush1.msra.mxu0 0.0
    %98 = vmatprep.subr.mxu0 0.0
    %99 = vmatpush1.msra.mxu0 0.0
    %100 = vmatprep.subr.mxu0 0.0
    %101 = vmatpush1.msra.mxu0 0.0
    %102 = vmatprep.subr.mxu0 0.0
    %103 = vmatpush1.msra.mxu0 0.0
    %104 = vmatprep.subr.mxu0 0.0
    %105 = vmatpush1.msra.mxu0 0.0
    %106 = vmatprep.subr.mxu0 0.0
    %107 = vmatpush1.msra.mxu0 0.0
    %108 = vmatprep.subr.mxu0 0.0
    %109 = vmatpush1.msra.mxu0 0.0
    %110 = vmatprep.subr.mxu0 0.0
    %111 = vmatpush1.msra.mxu0 0.0
    %112 = vmatprep.subr.mxu0 0.0
    %113 = vmatpush1.msra.mxu0 0.0
    %114 = vmatprep.subr.mxu0 0.0
    %115 = vmatpush1.msra.mxu0 0.0
    %116 = vmatprep.subr.mxu0 0.0
    %117 = vmatpush1.msra.mxu0 0.0
    %118 = vmatprep.subr.mxu0 0.0
    %119 = vmatpush1.msra.mxu0 0.0
    %120 = vmatprep.subr.mxu0 0.0
    %121 = vmatpush1.msra.mxu0 0.0
    %122 = vmatprep.subr.mxu0 0.0
    %123 = vmatpush1.msra.mxu0 0.0
    %124 = vmatprep.subr.mxu0 0.0
    %125 = vmatpush1.msra.mxu0 0.0
    %126 = vmatprep.subr.mxu0 0.0
    %127 = vmatpush1.msra.mxu0 0.0
    %128 = vmatprep.subr.mxu0 0.0
    %129 = vmatpush1.msra.mxu0 0.0
    %130 = vmatprep.mubr.f32.mxu0 0.0
    %131 = vmatmul.mubr.f32.gmra.mrb[0].mxu0 %v64
    %v132 = vpop.f32.mrb[0].mxu0
    %v133 = vadd.f32 %v55, %v132
    %v134 = vpop.f32.mrb[0].mxu0
    %v135 = vadd.f32 %v59, %v134
    %136 = vdwg.mxu0
    %v137 = vmax.f32 %v133, 0.0
    %v138 = vmax.f32 %v135, 0.0
    %v139 = vld [vmem:[#allocation2] sm:$0xff]
    %v140 = vld [vmem:[#allocation2 + $0x8] sm:$0xff]
    %v141 = vld [vmem:[#allocation2 + $0x10] sm:$0xff]
    %v142 = vld [vmem:[#allocation2 + $0x18] sm:$0xff]
    %v143 = vld [vmem:[#allocation2 + $0x20] sm:$0xff]
    %v144 = vld [vmem:[#allocation2 + $0x28] sm:$0xff]
    %v145 = vld [vmem:[#allocation2 + $0x30] sm:$0xff]
    %v146 = vld [vmem:[#allocation2 + $0x38] sm:$0xff]
    %v147 = vld [vmem:[#allocation2 + $0x40] sm:$0xff]
    %v148 = vld [vmem:[#allocation2 + $0x48] sm:$0xff]
    %v149 = vld [vmem:[#allocation2 + $0x50] sm:$0xff]
    %v150 = vld [vmem:[#allocation2 + $0x58] sm:$0xff]
    %v151 = vld [vmem:[#allocation2 + $0x60] sm:$0xff]
    %v152 = vld [vmem:[#allocation2 + $0x68] sm:$0xff]
    %v153 = vld [vmem:[#allocation2 + $0x70] sm:$0xff]
    %v154 = vld [vmem:[#allocation2 + $0x78] sm:$0xff]
    %v155 = vld [vmem:[#allocation2 + $0x80] sm:$0xff]
    %v156 = vld [vmem:[#allocation2 + $0x88] sm:$0xff]
    %v157 = vld [vmem:[#allocation2 + $0x90] sm:$0xff]
    %v158 = vld [vmem:[#allocation2 + $0x98] sm:$0xff]
    %v159 = vld [vmem:[#allocation2 + $0xa0] sm:$0xff]
    %v160 = vld [vmem:[#allocation2 + $0xa8] sm:$0xff]
    %v161 = vld [vmem:[#allocation2 + $0xb0] sm:$0xff]
    %v162 = vld [vmem:[#allocation2 + $0xb8] sm:$0xff]
    %v163 = vld [vmem:[#allocation2 + $0xc0] sm:$0xff]
    %v164 = vld [vmem:[#allocation2 + $0xc8] sm:$0xff]
    %v165 = vld [vmem:[#allocation2 + $0xd0] sm:$0xff]
    %v166 = vld [vmem:[#allocation2 + $0xd8] sm:$0xff]
    %v167 = vld [vmem:[#allocation2 + $0xe0] sm:$0xff]
    %v168 = vld [vmem:[#allocation2 + $0xe8] sm:$0xff]
    %v169 = vld [vmem:[#allocation2 + $0xf0] sm:$0xff]
    %v170 = vld [vmem:[#allocation2 + $0xf8] sm:$0xff]
    %v171 = vld [vmem:[#allocation2 + $0x100] sm:$0xff]
    %v172 = vld [vmem:[#allocation2 + $0x108] sm:$0xff]
    %v173 = vld [vmem:[#allocation2 + $0x110] sm:$0xff]
    %v174 = vld [vmem:[#allocation2 + $0x118] sm:$0xff]
    %v175 = vld [vmem:[#allocation2 + $0x120] sm:$0xff]
    %v176 = vld [vmem:[#allocation2 + $0x128] sm:$0xff]
    %v177 = vld [vmem:[#allocation2 + $0x130] sm:$0xff]
    %v178 = vld [vmem:[#allocation2 + $0x138] sm:$0xff]
    %v179 = vld [vmem:[#allocation2 + $0x140] sm:$0xff]
    %v180 = vld [vmem:[#allocation2 + $0x148] sm:$0xff]
    %v181 = vld [vmem:[#allocation2 + $0x150] sm:$0xff]
    %v182 = vld [vmem:[#allocation2 + $0x158] sm:$0xff]
    %v183 = vld [vmem:[#allocation2 + $0x160] sm:$0xff]
    %v184 = vld [vmem:[#allocation2 + $0x168] sm:$0xff]
    %v185 = vld [vmem:[#allocation2 + $0x170] sm:$0xff]
    %v186 = vld [vmem:[#allocation2 + $0x178] sm:$0xff]
    %v187 = vld [vmem:[#allocation2 + $0x180] sm:$0xff]
    %v188 = vld [vmem:[#allocation2 + $0x188] sm:$0xff]
    %v189 = vld [vmem:[#allocation2 + $0x190] sm:$0xff]
    %v190 = vld [vmem:[#allocation2 + $0x198] sm:$0xff]
    %v191 = vld [vmem:[#allocation2 + $0x1a0] sm:$0xff]
    %v192 = vld [vmem:[#allocation2 + $0x1a8] sm:$0xff]
    %v193 = vld [vmem:[#allocation2 + $0x1b0] sm:$0xff]
    %v194 = vld [vmem:[#allocation2 + $0x1b8] sm:$0xff]
    %v195 = vld [vmem:[#allocation2 + $0x1c0] sm:$0xff]
    %v196 = vld [vmem:[#allocation2 + $0x1c8] sm:$0xff]
    %v197 = vld [vmem:[#allocation2 + $0x1d0] sm:$0xff]
    %v198 = vld [vmem:[#allocation2 + $0x1d8] sm:$0xff]
    %v199 = vld [vmem:[#allocation2 + $0x1e0] sm:$0xff]
    %v200 = vld [vmem:[#allocation2 + $0x1e8] sm:$0xff]
    %v201 = vld [vmem:[#allocation2 + $0x1f0] sm:$0xff]
    %v202 = vld [vmem:[#allocation2 + $0x1f8] sm:$0xff]
    %v203 = vld [vmem:[%s4] sm:$0x3]
    %v205 = vlaneseq
    %v206 = vshrl.u32 %v205, 7
    %v207 = vsub.s32 0, %v206
    %v208 = vrot.slane %v203, %v207
    %v209 = vlaneseq
    %v210 = vshrl.u32 %v209, 7
    %v211 = vsub.s32 1, %v210
    %v212 = vrot.slane %v203, %v211
    %215 = vmatprep.subr.mxu0 %v140
    %216 = vmatpush1.msra.mxu0 %v139
    %217 = vmatprep.subr.mxu0 %v142
    %218 = vmatpush1.msra.mxu0 %v141
    %219 = vmatprep.subr.mxu0 %v144
    %220 = vmatpush1.msra.mxu0 %v143
    %221 = vmatprep.subr.mxu0 %v146
    %222 = vmatpush1.msra.mxu0 %v145
    %223 = vmatprep.subr.mxu0 %v148
    %224 = vmatpush1.msra.mxu0 %v147
    %225 = vmatprep.subr.mxu0 %v150
    %226 = vmatpush1.msra.mxu0 %v149
    %227 = vmatprep.subr.mxu0 %v152
    %228 = vmatpush1.msra.mxu0 %v151
    %229 = vmatprep.subr.mxu0 %v154
    %230 = vmatpush1.msra.mxu0 %v153
    %231 = vmatprep.subr.mxu0 %v156
    %232 = vmatpush1.msra.mxu0 %v155
    %233 = vmatprep.subr.mxu0 %v158
    %234 = vmatpush1.msra.mxu0 %v157
    %235 = vmatprep.subr.mxu0 %v160
    %236 = vmatpush1.msra.mxu0 %v159
    %237 = vmatprep.subr.mxu0 %v162
    %238 = vmatpush1.msra.mxu0 %v161
    %239 = vmatprep.subr.mxu0 %v164
    %240 = vmatpush1.msra.mxu0 %v163
    %241 = vmatprep.subr.mxu0 %v166
    %242 = vmatpush1.msra.mxu0 %v165
    %243 = vmatprep.subr.mxu0 %v168
    %244 = vmatpush1.msra.mxu0 %v167
    %245 = vmatprep.subr.mxu0 %v170
    %246 = vmatpush1.msra.mxu0 %v169
    %247 = vmatprep.subr.mxu0 %v172
    %248 = vmatpush1.msra.mxu0 %v171
    %249 = vmatprep.subr.mxu0 %v174
    %250 = vmatpush1.msra.mxu0 %v173
    %251 = vmatprep.subr.mxu0 %v176
    %252 = vmatpush1.msra.mxu0 %v175
    %253 = vmatprep.subr.mxu0 %v178
    %254 = vmatpush1.msra.mxu0 %v177
    %255 = vmatprep.subr.mxu0 %v180
    %256 = vmatpush1.msra.mxu0 %v179
    %257 = vmatprep.subr.mxu0 %v182
    %258 = vmatpush1.msra.mxu0 %v181
    %259 = vmatprep.subr.mxu0 %v184
    %260 = vmatpush1.msra.mxu0 %v183
    %261 = vmatprep.subr.mxu0 %v186
    %262 = vmatpush1.msra.mxu0 %v185
    %263 = vmatprep.subr.mxu0 %v188
    %264 = vmatpush1.msra.mxu0 %v187
    %265 = vmatprep.subr.mxu0 %v190
    %266 = vmatpush1.msra.mxu0 %v189
    %267 = vmatprep.subr.mxu0 %v192
    %268 = vmatpush1.msra.mxu0 %v191
    %269 = vmatprep.subr.mxu0 %v194
    %270 = vmatpush1.msra.mxu0 %v193
    %271 = vmatprep.subr.mxu0 %v196
    %272 = vmatpush1.msra.mxu0 %v195
    %273 = vmatprep.subr.mxu0 %v198
    %274 = vmatpush1.msra.mxu0 %v197
    %275 = vmatprep.subr.mxu0 %v200
    %276 = vmatpush1.msra.mxu0 %v199
    %277 = vmatprep.subr.mxu0 %v202
    %278 = vmatpush1.msra.mxu0 %v201
    %279 = vmatprep.mubr.f32.mxu0 %v138
    %280 = vmatmul.mubr.f32.gmra.mrb[0].mxu0 %v137
    %v281 = vpop.f32.mrb[0].mxu0
    %v282 = vadd.f32 %v208, %v281
    %v283 = vpop.f32.mrb[0].mxu0
    %v284 = vadd.f32 %v212, %v283
    %285 = vdwg.mxu0
    %v286 = vmax.f32 %v282, 0.0
    %v287 = vmax.f32 %v284, 0.0
    %v288 = vld [vmem:[%s5] sm:$0xff]
    %v289 = vld [vmem:[%s5 + $0x8] sm:$0xff]
    %v290 = vld [vmem:[%s5 + $0x10] sm:$0xff]
    %v291 = vld [vmem:[%s5 + $0x18] sm:$0xff]
    %v292 = vld [vmem:[%s5 + $0x20] sm:$0xff]
    %v293 = vld [vmem:[%s5 + $0x28] sm:$0xff]
    %v294 = vld [vmem:[%s5 + $0x30] sm:$0xff]
    %v295 = vld [vmem:[%s5 + $0x38] sm:$0xff]
    %v296 = vld [vmem:[%s5 + $0x40] sm:$0xff]
    %v297 = vld [vmem:[%s5 + $0x48] sm:$0xff]
    %v298 = vld [vmem:[%s5 + $0x50] sm:$0xff]
    %v299 = vld [vmem:[%s5 + $0x58] sm:$0xff]
    %v300 = vld [vmem:[%s5 + $0x60] sm:$0xff]
    %v301 = vld [vmem:[%s5 + $0x68] sm:$0xff]
    %v302 = vld [vmem:[%s5 + $0x70] sm:$0xff]
    %v303 = vld [vmem:[%s5 + $0x78] sm:$0xff]
    %v304 = vld [vmem:[%s5 + $0x80] sm:$0xff]
    %v305 = vld [vmem:[%s5 + $0x88] sm:$0xff]
    %v306 = vld [vmem:[%s5 + $0x90] sm:$0xff]
    %v307 = vld [vmem:[%s5 + $0x98] sm:$0xff]
    %v308 = vld [vmem:[%s5 + $0xa0] sm:$0xff]
    %v309 = vld [vmem:[%s5 + $0xa8] sm:$0xff]
    %v310 = vld [vmem:[%s5 + $0xb0] sm:$0xff]
    %v311 = vld [vmem:[%s5 + $0xb8] sm:$0xff]
    %v312 = vld [vmem:[%s5 + $0xc0] sm:$0xff]
    %v313 = vld [vmem:[%s5 + $0xc8] sm:$0xff]
    %v314 = vld [vmem:[%s5 + $0xd0] sm:$0xff]
    %v315 = vld [vmem:[%s5 + $0xd8] sm:$0xff]
    %v316 = vld [vmem:[%s5 + $0xe0] sm:$0xff]
    %v317 = vld [vmem:[%s5 + $0xe8] sm:$0xff]
    %v318 = vld [vmem:[%s5 + $0xf0] sm:$0xff]
    %v319 = vld [vmem:[%s5 + $0xf8] sm:$0xff]
    %v320 = vld [vmem:[%s6] sm:$0x1]
    %v322 = vlaneseq
    %v323 = vshrl.u32 %v322, 7
    %v324 = vsub.s32 0, %v323
    %v325 = vrot.slane %v320, %v324
    %327 = vmatprep.subr.mxu0 0.0
    %328 = vmatpush1.msra.mxu0 %v288
    %329 = vmatprep.subr.mxu0 0.0
    %330 = vmatpush1.msra.mxu0 %v289
    %331 = vmatprep.subr.mxu0 0.0
    %332 = vmatpush1.msra.mxu0 %v290
    %333 = vmatprep.subr.mxu0 0.0
    %334 = vmatpush1.msra.mxu0 %v291
    %335 = vmatprep.subr.mxu0 0.0
    %336 = vmatpush1.msra.mxu0 %v292
    %337 = vmatprep.subr.mxu0 0.0
    %338 = vmatpush1.msra.mxu0 %v293
    %339 = vmatprep.subr.mxu0 0.0
    %340 = vmatpush1.msra.mxu0 %v294
    %341 = vmatprep.subr.mxu0 0.0
    %342 = vmatpush1.msra.mxu0 %v295
    %343 = vmatprep.subr.mxu0 0.0
    %344 = vmatpush1.msra.mxu0 %v296
    %345 = vmatprep.subr.mxu0 0.0
    %346 = vmatpush1.msra.mxu0 %v297
    %347 = vmatprep.subr.mxu0 0.0
    %348 = vmatpush1.msra.mxu0 %v298
    %349 = vmatprep.subr.mxu0 0.0
    %350 = vmatpush1.msra.mxu0 %v299
    %351 = vmatprep.subr.mxu0 0.0
    %352 = vmatpush1.msra.mxu0 %v300
    %353 = vmatprep.subr.mxu0 0.0
    %354 = vmatpush1.msra.mxu0 %v301
    %355 = vmatprep.subr.mxu0 0.0
    %356 = vmatpush1.msra.mxu0 %v302
    %357 = vmatprep.subr.mxu0 0.0
    %358 = vmatpush1.msra.mxu0 %v303
    %359 = vmatprep.subr.mxu0 0.0
    %360 = vmatpush1.msra.mxu0 %v304
    %361 = vmatprep.subr.mxu0 0.0
    %362 = vmatpush1.msra.mxu0 %v305
    %363 = vmatprep.subr.mxu0 0.0
    %364 = vmatpush1.msra.mxu0 %v306
    %365 = vmatprep.subr.mxu0 0.0
    %366 = vmatpush1.msra.mxu0 %v307
    %367 = vmatprep.subr.mxu0 0.0
    %368 = vmatpush1.msra.mxu0 %v308
    %369 = vmatprep.subr.mxu0 0.0
    %370 = vmatpush1.msra.mxu0 %v309
    %371 = vmatprep.subr.mxu0 0.0
    %372 = vmatpush1.msra.mxu0 %v310
    %373 = vmatprep.subr.mxu0 0.0
    %374 = vmatpush1.msra.mxu0 %v311
    %375 = vmatprep.subr.mxu0 0.0
    %376 = vmatpush1.msra.mxu0 %v312
    %377 = vmatprep.subr.mxu0 0.0
    %378 = vmatpush1.msra.mxu0 %v313
    %379 = vmatprep.subr.mxu0 0.0
    %380 = vmatpush1.msra.mxu0 %v314
    %381 = vmatprep.subr.mxu0 0.0
    %382 = vmatpush1.msra.mxu0 %v315
    %383 = vmatprep.subr.mxu0 0.0
    %384 = vmatpush1.msra.mxu0 %v316
    %385 = vmatprep.subr.mxu0 0.0
    %386 = vmatpush1.msra.mxu0 %v317
    %387 = vmatprep.subr.mxu0 0.0
    %388 = vmatpush1.msra.mxu0 %v318
    %389 = vmatprep.subr.mxu0 0.0
    %390 = vmatpush1.msra.mxu0 %v319
    %391 = vmatprep.mubr.f32.mxu0 %v287
    %392 = vmatmul.mubr.f32.gmra.mrb[0].mxu0 %v286
    %v393 = vpop.f32.mrb[0].mxu0
    %v394 = vadd.f32 %v325, %v393
    %v395 = vpop.f32.mrb[0].mxu0
    %396 = vdwg.mxu0
    %v397 = vtanh.pop %v394
    %v398 = vmul.f32 %v397, 2.0
    %vm399 = vcmask 64512
    %400 = vst.msk [vmem:[#allocation5] sm:$0xff] %vm399, %v398
    // Predicated region
    $region34: #{tpu_custom_call.1} parent=1 // pred_check
      _
    $region35: #{tpu_custom_call.1} parent=1 // pred_check_branch
      %402 = sbr.rel (0) target = $region37
    $region36: #{tpu_custom_call.1} parent=1 // pred_region
      %s404 = ssub.s32 128, 32
      %405 = vsyncadd [#allocation4], %s404
      %s406 = sshll.u32 [#allocation5], 4
      %s407 = int_to_ptr.vmem [resolvable:$true] %s406
      %412 = dma.vmem_to_hbm [thread:$0]  %s407, 32, %s7, [#allocation4], 32, 32, 2
    $region37: #{tpu_custom_call.1} parent=1 // pred_fallthru
      _
    // Predicated region
    $region38: #{tpu_custom_call.1} parent=1 // pred_check
      _
    $region39: #{tpu_custom_call.1} parent=1 // pred_check_branch
      %414 = sbr.rel (0) target = $region41
    $region40: #{tpu_custom_call.1} parent=1 // pred_region
      %415 = dma.done [#allocation4], 128
    $region41: #{tpu_custom_call.1} parent=1 // pred_fallthru
      _
    %416 = vsyncpa [#allocation3], 1
    %417 = vsyncpa [#allocation4], 1

</llo_original>
